<compile_context>
chip_gen: v5e
topology: v5e:2x2
jax: 0.10.0
libtpu: 0.0.40
codegen_flags: <defaults>
</compile_context>

<pallas_src>
import jax
import jax.numpy as jnp
from jax.experimental import pallas as pl
from jax.experimental.pallas import tpu as pltpu


_LANE = 128
_XW_RESIDENT_BUDGET = 24 * 1024 * 1024  # bytes for the (double-buffered) resident XW


def _round_up(x, m):
    return ((x + m - 1) // m) * m


def sgcn_tiles(n, tm=512, tk=2048):
    """Pick tile sizes (clamped for small graphs) and independent paddings."""
    n128 = _round_up(n, _LANE)
    tm = min(tm, n128)
    tk = min(tk, n128)
    n_rows_pad = _round_up(n, tm)   # independent row pad (<= one tm tile waste)
    n_k_pad = _round_up(n, tk)      # independent contraction pad
    return tm, tk, n_rows_pad, n_k_pad


def prepare_adjacency(adj, n_rows_pad, n_k_pad):
    """Pad + narrow the dense adjacency ONCE; reuse across layers / steps.

    A is strictly {0,1} (unweighted copy_src/sum aggregation), so the int8
    narrowing is lossless.  Doing this once avoids an extra full f32 read +
    write of A on every forward call of this memory-bound kernel.
    """
    n_r, n_c = adj.shape
    if (n_r, n_c) == (n_rows_pad, n_k_pad):
        return adj if adj.dtype == jnp.int8 else adj.astype(jnp.int8)
    out = jnp.zeros((n_rows_pad, n_k_pad), jnp.int8)
    return out.at[:n_r, :n_c].set(adj.astype(jnp.int8))


def _sgcn_kernel(a_ref, xw_ref, b_ref, out_ref):
    """One (tm, f_pad) output tile; the k grid axis accumulates A_tile @ XW_tile."""
    k = pl.program_id(1)
    tk = a_ref.shape[1]

    @pl.when(k == 0)
    def _init():
        # Fold the bias into the resident output block instead of an epilogue add.
        out_ref[...] = jnp.broadcast_to(b_ref[...], out_ref.shape)

    if xw_ref.shape[0] == tk:
        # Streamed (tk, f_pad) panel (or a single-panel graph).
        xw_tile = xw_ref[...]
    else:
        # Fully-resident XW: slice the current k panel out of VMEM.
        start = pl.multiple_of(k * tk, tk)
        xw_tile = xw_ref[pl.ds(start, tk), :]

    # int8 {0,1} adjacency -> bf16 (lossless), native bf16 MXU, f32 accumulation
    # directly into the resident f32 output block.
    out_ref[...] += jnp.dot(a_ref[...].astype(jnp.bfloat16), xw_tile,
                            preferred_element_type=jnp.float32)


def sgcn_forward(adj_p, feature, weight, bias, unit, *, tm, tk):
    """adj_p: padded int8 adjacency from prepare_adjacency (A[i,j] = edge j->i);
    feature: [N, in_feats]; weight: [out_feats, in_feats] (nn.Linear layout);
    bias: [out_feats]; unit: [N] int.
    Returns linear(A @ feature) gathered at nodes with unit == 1."""
    n, _ = feature.shape
    out_feats = weight.shape[0]
    n_rows_pad, n_k_pad = adj_p.shape
    assert n_rows_pad % tm == 0 and n_k_pad % tk == 0
    f_pad = _round_up(out_feats, _LANE)

    # Fold the linear weight into the features once (tiny matmul, f32 -> bf16).
    # NOTE: bf16 XW trades ~1e-2 relative error for half the XW stream; keep it
    # f32 here if tighter fidelity vs the f32 PyTorch module is required.
    xw = jnp.dot(feature.astype(jnp.float32), weight.astype(jnp.float32).T)
    xw_p = jnp.zeros((n_k_pad, f_pad), jnp.bfloat16)
    xw_p = xw_p.at[:n, :out_feats].set(xw.astype(jnp.bfloat16))

    b_p = jnp.zeros((1, f_pad), jnp.float32)
    b_p = b_p.at[0, :out_feats].set(bias.astype(jnp.float32))

    grid = (n_rows_pad // tm, n_k_pad // tk)

    # Keep XW fully resident (fetched once) when it fits the VMEM budget;
    # otherwise stream (tk, f_pad) panels (re-fetched per row tile).
    xw_bytes = n_k_pad * f_pad * 2
    xw_resident = (2 * xw_bytes) <= _XW_RESIDENT_BUDGET
    if xw_resident:
        xw_spec = pl.BlockSpec((n_k_pad, f_pad), lambda i, k: (0, 0))
        xw_hbm_bytes = xw_bytes
        xw_buf_bytes = 2 * xw_bytes
    else:
        xw_spec = pl.BlockSpec((tk, f_pad), lambda i, k: (k, 0))
        xw_hbm_bytes = xw_bytes * grid[0]
        xw_buf_bytes = 2 * tk * f_pad * 2

    # Live-VMEM estimate: double-buffered int8 A tiles + f32 output blocks
    # + XW buffers + bias.  Cap the requested limit at 48 MiB so it is safe
    # on every generation (v5e 16 MiB scoped default, v7x 64 MiB physical).
    vmem_est = (2 * tm * tk * 1
                + 2 * tm * f_pad * 4
                + xw_buf_bytes
                + 2 * f_pad * 4)
    vmem_limit = min(48 * 2**20, max(32 * 2**20, (vmem_est * 5) // 4))

    cost = pl.CostEstimate(
        flops=2 * n_rows_pad * n_k_pad * f_pad,
        transcendentals=0,
        bytes_accessed=(adj_p.size * 1          # int8 A, read once
                        + xw_hbm_bytes          # XW once (resident) or per row tile
                        + b_p.size * 4
                        + n_rows_pad * f_pad * 4),
    )

    y = pl.pallas_call(
        _sgcn_kernel,
        out_shape=jax.ShapeDtypeStruct((n_rows_pad, f_pad), jnp.float32),
        grid_spec=pltpu.PrefetchScalarGridSpec(
            num_scalar_prefetch=0,
            grid=grid,
            in_specs=[
                pl.BlockSpec((tm, tk), lambda i, k: (i, k)),   # int8 A tile
                xw_spec,                                       # XW (resident or panel)
                pl.BlockSpec((1, f_pad), lambda i, k: (0, 0)), # bias row
            ],
            out_specs=pl.BlockSpec((tm, f_pad), lambda i, k: (i, 0)),
        ),
        compiler_params=pltpu.CompilerParams(
            dimension_semantics=("parallel", "arbitrary"),
            vmem_limit_bytes=int(vmem_limit)),
        cost_estimate=cost,
    )(adj_p, xw_p, b_p)

    y = y[:n, :out_feats].astype(feature.dtype)

    # snode_id = nodes with unit == 1.
    # TODO(synk): data-dependent output length; under jax.jit this gather must
    # use a static padded size (or stay outside jit) — kept eager here.
    snode_id = jnp.nonzero(unit == 1)[0]
    return y[snode_id]


if __name__ == "__main__":
    key = jax.random.PRNGKey(0)
    k1, k2, k3, k4, k5 = jax.random.split(key, 5)

    N, IN_FEATS, OUT_FEATS = 256, 8, 32

    # Deterministic synthetic graph: random directed adjacency (A[i,j] = j->i).
    adj = (jax.random.uniform(k1, (N, N)) < 0.1).astype(jnp.float32)
    feature = jax.random.normal(k2, (N, IN_FEATS), dtype=jnp.float32)

    # nn.Linear(in_feats, out_feats) parameters.
    weight = jax.random.normal(k3, (OUT_FEATS, IN_FEATS), dtype=jnp.float32) * 0.1
    bias = jax.random.normal(k4, (OUT_FEATS,), dtype=jnp.float32) * 0.1

    # 'unit' node attribute: mark roughly half the nodes as sentence nodes.
    unit = (jax.random.uniform(k5, (N,)) < 0.5).astype(jnp.int32)

    # Tile selection + one-time adjacency preparation (reused across calls).
    tm, tk, n_rows_pad, n_k_pad = sgcn_tiles(N)
    adj_p = jax.block_until_ready(prepare_adjacency(adj, n_rows_pad, n_k_pad))

    out = sgcn_forward(adj_p, feature, weight, bias, unit, tm=tm, tk=tk)
    out = jax.block_until_ready(out)

    snode_id = jnp.nonzero(unit == 1)[0]

    # Check 1: bf16-consistent reference (same operand dtypes as the kernel,
    # f32 accumulation) — validates the kernel itself tightly.
    xw_bf = (feature @ weight.T).astype(jnp.bfloat16)
    ref_bf = jnp.dot(adj.astype(jnp.bfloat16), xw_bf,
                     preferred_element_type=jnp.float32) + bias
    assert jnp.allclose(out, ref_bf[snode_id], atol=1e-3, rtol=1e-3)

    # Check 2: full-precision module reference (loose tol due to bf16 XW).
    ref_f32 = (adj @ feature) @ weight.T + bias
    assert jnp.allclose(out, ref_f32[snode_id], atol=5e-2, rtol=5e-2)

    print("KERNEL_OK")
</pallas_src>

<mosaic_0001>
module attributes {stable_mosaic.version = 11 : i64} {
  func.func @_sgcn_kernel(%arg0: i32, %arg1: i32, %arg2: memref<256x256xi8, #tpu.memory_space<vmem>>, %arg3: memref<256x128xbf16, #tpu.memory_space<vmem>>, %arg4: memref<1x128xf32, #tpu.memory_space<vmem>>, %arg5: memref<256x128xf32, #tpu.memory_space<vmem>>) attributes {dimension_semantics = [#tpu.dimension_semantics<parallel>, #tpu.dimension_semantics<arbitrary>], iteration_bounds = array<i64: 1, 1>, scalar_prefetch = 0 : i64, scratch_operands = 0 : i64, tpu.core_type = #tpu.core_type<tc>, window_params = [{transform_indices = @transform_0, window_bounds = array<i64: 256, 256>}, {pipeline_mode = #tpu.pipeline_mode<synchronous>, transform_indices = @transform_1, window_bounds = array<i64: 256, 128>}, {pipeline_mode = #tpu.pipeline_mode<synchronous>, transform_indices = @transform_2, window_bounds = array<i64: 1, 128>}, {transform_indices = @transform_3, window_bounds = array<i64: 256, 128>}]} {
    %c0_i32 = arith.constant 0 : i32
    %0 = arith.cmpi eq, %arg1, %c0_i32 : i32
    %1 = arith.extui %0 : i1 to i32
    %c0_i32_0 = arith.constant 0 : i32
    %2 = arith.cmpi ne, %1, %c0_i32_0 : i32
    scf.if %2 {
      %c0_8 = arith.constant 0 : index
      %c0_9 = arith.constant 0 : index
      %10 = vector.load %arg4[%c0_8, %c0_9] : memref<1x128xf32, #tpu.memory_space<vmem>>, vector<1x128xf32>
      %11 = vector.shape_cast %10 : vector<1x128xf32> to vector<1x128xf32>
      %12 = vector.broadcast %11 : vector<1x128xf32> to vector<256x128xf32>
      %c0_10 = arith.constant 0 : index
      %c0_11 = arith.constant 0 : index
      %13 = vector.load %arg5[%c0_10, %c0_11] : memref<256x128xf32, #tpu.memory_space<vmem>>, vector<256x128xf32>
      tpu.vector_store %arg5[%c0_10, %c0_11], %12 {strides = array<i32>} : memref<256x128xf32, #tpu.memory_space<vmem>>, vector<256x128xf32>,
    } else {
    }
    %c0 = arith.constant 0 : index
    %c0_1 = arith.constant 0 : index
    %3 = vector.load %arg3[%c0, %c0_1] : memref<256x128xbf16, #tpu.memory_space<vmem>>, vector<256x128xbf16>
    %c0_2 = arith.constant 0 : index
    %c0_3 = arith.constant 0 : index
    %4 = vector.load %arg5[%c0_2, %c0_3] : memref<256x128xf32, #tpu.memory_space<vmem>>, vector<256x128xf32>
    %c0_4 = arith.constant 0 : index
    %c0_5 = arith.constant 0 : index
    %5 = vector.load %arg2[%c0_4, %c0_5] : memref<256x256xi8, #tpu.memory_space<vmem>>, vector<256x256xi8>
    %6 = arith.sitofp %5 : vector<256x256xi8> to vector<256x256xbf16>
    %cst = arith.constant dense<0.000000e+00> : vector<256x128xf32>
    %7 = tpu.matmul %6, %3, %cst {dimension_numbers = #tpu.dot_dimension_numbers<[1], [0], [0], [1], [0, 0, 1, 1], [], []>} : vector<256x256xbf16>, vector<256x128xbf16>, vector<256x128xf32> -> vector<256x128xf32>
    %8 = arith.addf %4, %7 : vector<256x128xf32>
    %c0_6 = arith.constant 0 : index
    %c0_7 = arith.constant 0 : index
    %9 = vector.load %arg5[%c0_6, %c0_7] : memref<256x128xf32, #tpu.memory_space<vmem>>, vector<256x128xf32>
    tpu.vector_store %arg5[%c0_6, %c0_7], %8 {strides = array<i32>} : memref<256x128xf32, #tpu.memory_space<vmem>>, vector<256x128xf32>,
    return
  }
  func.func @transform_0(%arg0: i32, %arg1: i32) -> (i32, i32) {
    %c0_i32 = arith.constant 0 : i32
    return %arg0, %arg1 : i32, i32
  }
  func.func @transform_1(%arg0: i32, %arg1: i32) -> (i32, i32) {
    %c0_i32 = arith.constant 0 : i32
    %c0_i32_0 = arith.constant 0 : i32
    %c0_i32_1 = arith.constant 0 : i32
    return %c0_i32, %c0_i32_0 : i32, i32
  }
  func.func @transform_2(%arg0: i32, %arg1: i32) -> (i32, i32) {
    %c0_i32 = arith.constant 0 : i32
    %c0_i32_0 = arith.constant 0 : i32
    %c0_i32_1 = arith.constant 0 : i32
    return %c0_i32, %c0_i32_0 : i32, i32
  }
  func.func @transform_3(%arg0: i32, %arg1: i32) -> (i32, i32) {
    %c0_i32 = arith.constant 0 : i32
    %c0_i32_0 = arith.constant 0 : i32
    return %arg0, %c0_i32 : i32, i32
  }
}

</mosaic_0001>

<llo_original>
// kernel: tpu_custom_call.1
$region0: #{tpu_custom_call.1}
  #allocation0 [shape = 'u32[]', space=smem, size = 0x4, offset = 0x4, fixed_abs, tag = 'smem constant byte address 0x4 - core index']
  #allocation1 [shape = 'u32[72,128]{1,0:T(1,128)}', space=vmem, size = 0x9000, scoped, tag = 'internal scratch']
  %s0 = inlined_call_operand.hbm [shape: s8[256,256], index: 0, kind: input, shape index: {}]
  %s1 = inlined_call_operand.hbm [shape: bf16[256,128], index: 1, kind: input, shape index: {}]
  %s2 = inlined_call_operand.vmem [shape: f32[1,128], index: 2, kind: input, shape index: {}]
  %s3 = inlined_call_operand.hbm [shape: f32[256,128], index: 3, kind: output, shape index: {}]
  %s4 = sld [smem:[#allocation0]]
  $region34: #{tpu_custom_call.1} parent=0
    _
  %s6 = ssub.s32 1, %s4
  %s7 = scalar_select 0, %s6, %s4
  $region1: #{tpu_custom_call.1} parent=0
    #allocation2 [shape = 'u8[65536]{0}', space=vmem, size = 0x10000, scoped, tag = 'input window, operand 0, single buffered']
    #allocation3 [shape = 's32[1]{0}', space=sflag, size = 0x4, scoped, tag = 'scoped memory for tpu_custom_call.1']
    #allocation4 [shape = 's32[1]{0}', space=sflag, size = 0x4, scoped, tag = 'scoped memory for tpu_custom_call.1']
    #allocation5 [shape = 'u8[65536]{0}', space=vmem, size = 0x10000, scoped, tag = 'input window, operand 1, single buffered']
    #allocation6 [shape = 's32[1]{0}', space=sflag, size = 0x4, scoped, tag = 'scoped memory for tpu_custom_call.1']
    #allocation7 [shape = 'u8[131072]{0}', space=vmem, size = 0x20000, scoped, tag = 'output window, operand 0, single buffered']
    %8 = vsyncpa [#allocation3], 0
    %9 = vsyncpa [#allocation6], 0
    %10 = vsyncpa [#allocation4], 0
    // Predicated region
    $region2: #{tpu_custom_call.1} parent=1 // pred_check
      _
    $region3: #{tpu_custom_call.1} parent=1 // pred_check_branch
      %12 = sbr.rel (0) target = $region5
    $region4: #{tpu_custom_call.1} parent=1 // pred_region
      %14 = vsyncadd [#allocation3], 0
      %s15 = sshll.u32 %s0, 4
      %s16 = int_to_ptr.hbm [resolvable:$true] %s15
      %s17 = sshll.u32 [#allocation2], 4
      %s18 = int_to_ptr.vmem [resolvable:$true] %s17
      %23 = dma.hbm_to_vmem [thread:$0]  %s16, 2048, %s18, [#allocation3], 256, 256, 16
    $region5: #{tpu_custom_call.1} parent=1 // pred_fallthru
      _
    // Predicated region
    $region6: #{tpu_custom_call.1} parent=1 // pred_check
      _
    $region7: #{tpu_custom_call.1} parent=1 // pred_check_branch
      %25 = sbr.rel (0) target = $region9
    $region8: #{tpu_custom_call.1} parent=1 // pred_region
      %27 = vsyncadd [#allocation6], 0
      %s28 = sshll.u32 %s1, 4
      %s29 = int_to_ptr.hbm [resolvable:$true] %s28
      %s30 = sshll.u32 [#allocation5], 4
      %s31 = int_to_ptr.vmem [resolvable:$true] %s30
      %36 = dma.hbm_to_vmem [thread:$0]  %s29, 2048, %s31, [#allocation6], 64, 64, 4
    $region9: #{tpu_custom_call.1} parent=1 // pred_fallthru
      _
    // Predicated region
    $region10: #{tpu_custom_call.1} parent=1 // pred_check
      _
    $region11: #{tpu_custom_call.1} parent=1 // pred_check_branch
      %38 = sbr.rel (0) target = $region13
    $region12: #{tpu_custom_call.1} parent=1 // pred_region
      _
    $region13: #{tpu_custom_call.1} parent=1 // pred_fallthru
      _
    // Predicated region
    $region14: #{tpu_custom_call.1} parent=1 // pred_check
      _
    $region15: #{tpu_custom_call.1} parent=1 // pred_check_branch
      %40 = sbr.rel (0) target = $region17
    $region16: #{tpu_custom_call.1} parent=1 // pred_region
      %42 = dma.done [#allocation3], 2048
    $region17: #{tpu_custom_call.1} parent=1 // pred_fallthru
      _
    // Predicated region
    $region18: #{tpu_custom_call.1} parent=1 // pred_check
      _
    $region19: #{tpu_custom_call.1} parent=1 // pred_check_branch
      %44 = sbr.rel (0) target = $region21
    $region20: #{tpu_custom_call.1} parent=1 // pred_region
      %46 = dma.done [#allocation6], 2048
    $region21: #{tpu_custom_call.1} parent=1 // pred_fallthru
      _
    %p47 = scmp.eq.s32.totalorder 0, 0
    // Predicated region
    $region22: #{tpu_custom_call.1} parent=1 // pred_check
      %p48 = pneg %p47
    $region23: #{tpu_custom_call.1} parent=1 // pred_check_branch
      %50 = sbr.rel (%p48) target = $region25
    $region24: #{tpu_custom_call.1} parent=1 // pred_region
      %v51 = vld [vmem:[%s2] sm:$0x1]
      %v53 = vperm.slane %v51, 0
      %55 = vst [vmem:[#allocation7] sm:$0xff] %v53
      %56 = vst [vmem:[#allocation7 + $0x8] sm:$0xff] %v53
      %57 = vst [vmem:[#allocation7 + $0x10] sm:$0xff] %v53
      %58 = vst [vmem:[#allocation7 + $0x18] sm:$0xff] %v53
      %59 = vst [vmem:[#allocation7 + $0x20] sm:$0xff] %v53
      %60 = vst [vmem:[#allocation7 + $0x28] sm:$0xff] %v53
      %61 = vst [vmem:[#allocation7 + $0x30] sm:$0xff] %v53
      %62 = vst [vmem:[#allocation7 + $0x38] sm:$0xff] %v53
      %63 = vst [vmem:[#allocation7 + $0x40] sm:$0xff] %v53
      %64 = vst [vmem:[#allocation7 + $0x48] sm:$0xff] %v53
      %65 = vst [vmem:[#allocation7 + $0x50] sm:$0xff] %v53
      %66 = vst [vmem:[#allocation7 + $0x58] sm:$0xff] %v53
      %67 = vst [vmem:[#allocation7 + $0x60] sm:$0xff] %v53
      %68 = vst [vmem:[#allocation7 + $0x68] sm:$0xff] %v53
      %69 = vst [vmem:[#allocation7 + $0x70] sm:$0xff] %v53
      %70 = vst [vmem:[#allocation7 + $0x78] sm:$0xff] %v53
      %71 = vst [vmem:[#allocation7 + $0x80] sm:$0xff] %v53
      %72 = vst [vmem:[#allocation7 + $0x88] sm:$0xff] %v53
      %73 = vst [vmem:[#allocation7 + $0x90] sm:$0xff] %v53
      %74 = vst [vmem:[#allocation7 + $0x98] sm:$0xff] %v53
      %75 = vst [vmem:[#allocation7 + $0xa0] sm:$0xff] %v53
      %76 = vst [vmem:[#allocation7 + $0xa8] sm:$0xff] %v53
      %77 = vst [vmem:[#allocation7 + $0xb0] sm:$0xff] %v53
      %78 = vst [vmem:[#allocation7 + $0xb8] sm:$0xff] %v53
      %79 = vst [vmem:[#allocation7 + $0xc0] sm:$0xff] %v53
      %80 = vst [vmem:[#allocation7 + $0xc8] sm:$0xff] %v53
      %81 = vst [vmem:[#allocation7 + $0xd0] sm:$0xff] %v53
      %82 = vst [vmem:[#allocation7 + $0xd8] sm:$0xff] %v53
      %83 = vst [vmem:[#allocation7 + $0xe0] sm:$0xff] %v53
      %84 = vst [vmem:[#allocation7 + $0xe8] sm:$0xff] %v53
      %85 = vst [vmem:[#allocation7 + $0xf0] sm:$0xff] %v53
      %86 = vst [vmem:[#allocation7 + $0xf8] sm:$0xff] %v53
    $region25: #{tpu_custom_call.1} parent=1 // pred_fallthru
      _
    %v87 = vld [vmem:[#allocation5] sm:$0xf]
    %v88 = vld [vmem:[#allocation5 + $0x4] sm:$0xf]
    %v89 = vld [vmem:[#allocation5 + $0x8] sm:$0xf]
    %v90 = vld [vmem:[#allocation5 + $0xc] sm:$0xf]
    %v91 = vld [vmem:[#allocation5 + $0x10] sm:$0xf]
    %v92 = vld [vmem:[#allocation5 + $0x14] sm:$0xf]
    %v93 = vld [vmem:[#allocation5 + $0x18] sm:$0xf]
    %v94 = vld [vmem:[#allocation5 + $0x1c] sm:$0xf]
    %v95 = vld [vmem:[#allocation5 + $0x20] sm:$0xf]
    %v96 = vld [vmem:[#allocation5 + $0x24] sm:$0xf]
    %v97 = vld [vmem:[#allocation5 + $0x28] sm:$0xf]
    %v98 = vld [vmem:[#allocation5 + $0x2c] sm:$0xf]
    %v99 = vld [vmem:[#allocation5 + $0x30] sm:$0xf]
    %v100 = vld [vmem:[#allocation5 + $0x34] sm:$0xf]
    %v101 = vld [vmem:[#allocation5 + $0x38] sm:$0xf]
    %v102 = vld [vmem:[#allocation5 + $0x3c] sm:$0xf]
    %v103 = vld [vmem:[#allocation5 + $0x40] sm:$0xf]
    %v104 = vld [vmem:[#allocation5 + $0x44] sm:$0xf]
    %v105 = vld [vmem:[#allocation5 + $0x48] sm:$0xf]
    %v106 = vld [vmem:[#allocation5 + $0x4c] sm:$0xf]
    %v107 = vld [vmem:[#allocation5 + $0x50] sm:$0xf]
    %v108 = vld [vmem:[#allocation5 + $0x54] sm:$0xf]
    %v109 = vld [vmem:[#allocation5 + $0x58] sm:$0xf]
    %v110 = vld [vmem:[#allocation5 + $0x5c] sm:$0xf]
    %v111 = vld [vmem:[#allocation5 + $0x60] sm:$0xf]
    %v112 = vld [vmem:[#allocation5 + $0x64] sm:$0xf]
    %v113 = vld [vmem:[#allocation5 + $0x68] sm:$0xf]
    %v114 = vld [vmem:[#allocation5 + $0x6c] sm:$0xf]
    %v115 = vld [vmem:[#allocation5 + $0x70] sm:$0xf]
    %v116 = vld [vmem:[#allocation5 + $0x74] sm:$0xf]
    %v117 = vld [vmem:[#allocation5 + $0x78] sm:$0xf]
    %v118 = vld [vmem:[#allocation5 + $0x7c] sm:$0xf]
    %v119 = vld [vmem:[#allocation7] sm:$0xff]
    %v120 = vld [vmem:[#allocation7 + $0x8] sm:$0xff]
    %v121 = vld [vmem:[#allocation7 + $0x10] sm:$0xff]
    %v122 = vld [vmem:[#allocation7 + $0x18] sm:$0xff]
    %v123 = vld [vmem:[#allocation7 + $0x20] sm:$0xff]
    %v124 = vld [vmem:[#allocation7 + $0x28] sm:$0xff]
    %v125 = vld [vmem:[#allocation7 + $0x30] sm:$0xff]
    %v126 = vld [vmem:[#allocation7 + $0x38] sm:$0xff]
    %v127 = vld [vmem:[#allocation7 + $0x40] sm:$0xff]
    %v128 = vld [vmem:[#allocation7 + $0x48] sm:$0xff]
    %v129 = vld [vmem:[#allocation7 + $0x50] sm:$0xff]
    %v130 = vld [vmem:[#allocation7 + $0x58] sm:$0xff]
    %v131 = vld [vmem:[#allocation7 + $0x60] sm:$0xff]
    %v132 = vld [vmem:[#allocation7 + $0x68] sm:$0xff]
    %v133 = vld [vmem:[#allocation7 + $0x70] sm:$0xff]
    %v134 = vld [vmem:[#allocation7 + $0x78] sm:$0xff]
    %v135 = vld [vmem:[#allocation7 + $0x80] sm:$0xff]
    %v136 = vld [vmem:[#allocation7 + $0x88] sm:$0xff]
    %v137 = vld [vmem:[#allocation7 + $0x90] sm:$0xff]
    %v138 = vld [vmem:[#allocation7 + $0x98] sm:$0xff]
    %v139 = vld [vmem:[#allocation7 + $0xa0] sm:$0xff]
    %v140 = vld [vmem:[#allocation7 + $0xa8] sm:$0xff]
    %v141 = vld [vmem:[#allocation7 + $0xb0] sm:$0xff]
    %v142 = vld [vmem:[#allocation7 + $0xb8] sm:$0xff]
    %v143 = vld [vmem:[#allocation7 + $0xc0] sm:$0xff]
    %v144 = vld [vmem:[#allocation7 + $0xc8] sm:$0xff]
    %v145 = vld [vmem:[#allocation7 + $0xd0] sm:$0xff]
    %v146 = vld [vmem:[#allocation7 + $0xd8] sm:$0xff]
    %v147 = vld [vmem:[#allocation7 + $0xe0] sm:$0xff]
    %v148 = vld [vmem:[#allocation7 + $0xe8] sm:$0xff]
    %v149 = vld [vmem:[#allocation7 + $0xf0] sm:$0xff]
    %v150 = vld [vmem:[#allocation7 + $0xf8] sm:$0xff]
    %v151 = vld [vmem:[#allocation2] sm:$0xff]
    %v152 = vld [vmem:[#allocation2 + $0x8] sm:$0xff]
    %v153 = vld [vmem:[#allocation2 + $0x10] sm:$0xff]
    %v154 = vld [vmem:[#allocation2 + $0x18] sm:$0xff]
    %v155 = vld [vmem:[#allocation2 + $0x20] sm:$0xff]
    %v156 = vld [vmem:[#allocation2 + $0x28] sm:$0xff]
    %v157 = vld [vmem:[#allocation2 + $0x30] sm:$0xff]
    %v158 = vld [vmem:[#allocation2 + $0x38] sm:$0xff]
    %v159 = vld [vmem:[#allocation2 + $0x40] sm:$0xff]
    %v160 = vld [vmem:[#allocation2 + $0x48] sm:$0xff]
    %v161 = vld [vmem:[#allocation2 + $0x50] sm:$0xff]
    %v162 = vld [vmem:[#allocation2 + $0x58] sm:$0xff]
    %v163 = vld [vmem:[#allocation2 + $0x60] sm:$0xff]
    %v164 = vld [vmem:[#allocation2 + $0x68] sm:$0xff]
    %v165 = vld [vmem:[#allocation2 + $0x70] sm:$0xff]
    %v166 = vld [vmem:[#allocation2 + $0x78] sm:$0xff]
    %v167 = vunpack.c.0.s8 %v151
    %v168 = vunpack.c.0.s8 %v152
    %v169 = vunpack.c.1.s8 %v151
    %v170 = vunpack.c.1.s8 %v152
    %v171 = vunpack.c.2.s8 %v151
    %v172 = vunpack.c.2.s8 %v152
    %v173 = vunpack.c.3.s8 %v151
    %v174 = vunpack.c.3.s8 %v152
    %v175 = vunpack.c.0.s8 %v153
    %v176 = vunpack.c.0.s8 %v154
    %v177 = vunpack.c.1.s8 %v153
    %v178 = vunpack.c.1.s8 %v154
    %v179 = vunpack.c.2.s8 %v153
    %v180 = vunpack.c.2.s8 %v154
    %v181 = vunpack.c.3.s8 %v153
    %v182 = vunpack.c.3.s8 %v154
    %v183 = vunpack.c.0.s8 %v155
    %v184 = vunpack.c.0.s8 %v156
    %v185 = vunpack.c.1.s8 %v155
    %v186 = vunpack.c.1.s8 %v156
    %v187 = vunpack.c.2.s8 %v155
    %v188 = vunpack.c.2.s8 %v156
    %v189 = vunpack.c.3.s8 %v155
    %v190 = vunpack.c.3.s8 %v156
    %v191 = vunpack.c.0.s8 %v157
    %v192 = vunpack.c.0.s8 %v158
    %v193 = vunpack.c.1.s8 %v157
    %v194 = vunpack.c.1.s8 %v158
    %v195 = vunpack.c.2.s8 %v157
    %v196 = vunpack.c.2.s8 %v158
    %v197 = vunpack.c.3.s8 %v157
    %v198 = vunpack.c.3.s8 %v158
    %v199 = vunpack.c.0.s8 %v159
    %v200 = vunpack.c.0.s8 %v160
    %v201 = vunpack.c.1.s8 %v159
    %v202 = vunpack.c.1.s8 %v160
    %v203 = vunpack.c.2.s8 %v159
    %v204 = vunpack.c.2.s8 %v160
    %v205 = vunpack.c.3.s8 %v159
    %v206 = vunpack.c.3.s8 %v160
    %v207 = vunpack.c.0.s8 %v161
    %v208 = vunpack.c.0.s8 %v162
    %v209 = vunpack.c.1.s8 %v161
    %v210 = vunpack.c.1.s8 %v162
    %v211 = vunpack.c.2.s8 %v161
    %v212 = vunpack.c.2.s8 %v162
    %v213 = vunpack.c.3.s8 %v161
    %v214 = vunpack.c.3.s8 %v162
    %v215 = vunpack.c.0.s8 %v163
    %v216 = vunpack.c.0.s8 %v164
    %v217 = vunpack.c.1.s8 %v163
    %v218 = vunpack.c.1.s8 %v164
    %v219 = vunpack.c.2.s8 %v163
    %v220 = vunpack.c.2.s8 %v164
    %v221 = vunpack.c.3.s8 %v163
    %v222 = vunpack.c.3.s8 %v164
    %v223 = vunpack.c.0.s8 %v165
    %v224 = vunpack.c.0.s8 %v166
    %v225 = vunpack.c.1.s8 %v165
    %v226 = vunpack.c.1.s8 %v166
    %v227 = vunpack.c.2.s8 %v165
    %v228 = vunpack.c.2.s8 %v166
    %v229 = vunpack.c.3.s8 %v165
    %v230 = vunpack.c.3.s8 %v166
    %v231 = vcvt.s32.f32 %v167
    %v232 = vcvt.s32.f32 %v168
    %v233 = vcvt.s32.f32 %v169
    %v234 = vcvt.s32.f32 %v170
    %v235 = vcvt.s32.f32 %v171
    %v236 = vcvt.s32.f32 %v172
    %v237 = vcvt.s32.f32 %v173
    %v238 = vcvt.s32.f32 %v174
    %v239 = vcvt.s32.f32 %v175
    %v240 = vcvt.s32.f32 %v176
    %v241 = vcvt.s32.f32 %v177
    %v242 = vcvt.s32.f32 %v178
    %v243 = vcvt.s32.f32 %v179
    %v244 = vcvt.s32.f32 %v180
    %v245 = vcvt.s32.f32 %v181
    %v246 = vcvt.s32.f32 %v182
    %v247 = vcvt.s32.f32 %v183
    %v248 = vcvt.s32.f32 %v184
    %v249 = vcvt.s32.f32 %v185
    %v250 = vcvt.s32.f32 %v186
    %v251 = vcvt.s32.f32 %v187
    %v252 = vcvt.s32.f32 %v188
    %v253 = vcvt.s32.f32 %v189
    %v254 = vcvt.s32.f32 %v190
    %v255 = vcvt.s32.f32 %v191
    %v256 = vcvt.s32.f32 %v192
    %v257 = vcvt.s32.f32 %v193
    %v258 = vcvt.s32.f32 %v194
    %v259 = vcvt.s32.f32 %v195
    %v260 = vcvt.s32.f32 %v196
    %v261 = vcvt.s32.f32 %v197
    %v262 = vcvt.s32.f32 %v198
    %v263 = vcvt.s32.f32 %v199
    %v264 = vcvt.s32.f32 %v200
    %v265 = vcvt.s32.f32 %v201
    %v266 = vcvt.s32.f32 %v202
    %v267 = vcvt.s32.f32 %v203
    %v268 = vcvt.s32.f32 %v204
    %v269 = vcvt.s32.f32 %v205
    %v270 = vcvt.s32.f32 %v206
    %v271 = vcvt.s32.f32 %v207
    %v272 = vcvt.s32.f32 %v208
    %v273 = vcvt.s32.f32 %v209
    %v274 = vcvt.s32.f32 %v210
    %v275 = vcvt.s32.f32 %v211
    %v276 = vcvt.s32.f32 %v212
    %v277 = vcvt.s32.f32 %v213
    %v278 = vcvt.s32.f32 %v214
    %v279 = vcvt.s32.f32 %v215
    %v280 = vcvt.s32.f32 %v216
    %v281 = vcvt.s32.f32 %v217
    %v282 = vcvt.s32.f32 %v218
    %v283 = vcvt.s32.f32 %v219
    %v284 = vcvt.s32.f32 %v220
    %v285 = vcvt.s32.f32 %v221
    %v286 = vcvt.s32.f32 %v222
    %v287 = vcvt.s32.f32 %v223
    %v288 = vcvt.s32.f32 %v224
    %v289 = vcvt.s32.f32 %v225
    %v290 = vcvt.s32.f32 %v226
    %v291 = vcvt.s32.f32 %v227
    %v292 = vcvt.s32.f32 %v228
    %v293 = vcvt.s32.f32 %v229
    %v294 = vcvt.s32.f32 %v230
    %v295 = vpack.c.bf16 %v233, %v231
    %v296 = vpack.c.bf16 %v234, %v232
    %v297 = vpack.c.bf16 %v237, %v235
    %v298 = vpack.c.bf16 %v238, %v236
    %v299 = vpack.c.bf16 %v241, %v239
    %v300 = vpack.c.bf16 %v242, %v240
    %v301 = vpack.c.bf16 %v245, %v243
    %v302 = vpack.c.bf16 %v246, %v244
    %v303 = vpack.c.bf16 %v249, %v247
    %v304 = vpack.c.bf16 %v250, %v248
    %v305 = vpack.c.bf16 %v253, %v251
    %v306 = vpack.c.bf16 %v254, %v252
    %v307 = vpack.c.bf16 %v257, %v255
    %v308 = vpack.c.bf16 %v258, %v256
    %v309 = vpack.c.bf16 %v261, %v259
    %v310 = vpack.c.bf16 %v262, %v260
    %v311 = vpack.c.bf16 %v265, %v263
    %v312 = vpack.c.bf16 %v266, %v264
    %v313 = vpack.c.bf16 %v269, %v267
    %v314 = vpack.c.bf16 %v270, %v268
    %v315 = vpack.c.bf16 %v273, %v271
    %v316 = vpack.c.bf16 %v274, %v272
    %v317 = vpack.c.bf16 %v277, %v275
    %v318 = vpack.c.bf16 %v278, %v276
    %v319 = vpack.c.bf16 %v281, %v279
    %v320 = vpack.c.bf16 %v282, %v280
    %v321 = vpack.c.bf16 %v285, %v283
    %v322 = vpack.c.bf16 %v286, %v284
    %v323 = vpack.c.bf16 %v289, %v287
    %v324 = vpack.c.bf16 %v290, %v288
    %v325 = vpack.c.bf16 %v293, %v291
    %v326 = vpack.c.bf16 %v294, %v292
    %v359 = vunpack.c.l.b16 %v87
    %v360 = vunpack.c.l.b16 %v88
    %v361 = vunpack.c.l.b16 %v89
    %v362 = vunpack.c.l.b16 %v90
    %v363 = vunpack.c.l.b16 %v91
    %v364 = vunpack.c.l.b16 %v92
    %v365 = vunpack.c.l.b16 %v93
    %v366 = vunpack.c.l.b16 %v94
    %v367 = vunpack.c.l.b16 %v95
    %v368 = vunpack.c.l.b16 %v96
    %v369 = vunpack.c.l.b16 %v97
    %v370 = vunpack.c.l.b16 %v98
    %v371 = vunpack.c.l.b16 %v99
    %v372 = vunpack.c.l.b16 %v100
    %v373 = vunpack.c.l.b16 %v101
    %v374 = vunpack.c.l.b16 %v102
    %v375 = vunpack.c.l.b16 %v103
    %v376 = vunpack.c.l.b16 %v104
    %v377 = vunpack.c.l.b16 %v105
    %v378 = vunpack.c.l.b16 %v106
    %v379 = vunpack.c.l.b16 %v107
    %v380 = vunpack.c.l.b16 %v108
    %v381 = vunpack.c.l.b16 %v109
    %v382 = vunpack.c.l.b16 %v110
    %v383 = vunpack.c.l.b16 %v111
    %v384 = vunpack.c.l.b16 %v112
    %v385 = vunpack.c.l.b16 %v113
    %v386 = vunpack.c.l.b16 %v114
    %v387 = vunpack.c.l.b16 %v115
    %v388 = vunpack.c.l.b16 %v116
    %v389 = vunpack.c.l.b16 %v117
    %v390 = vunpack.c.l.b16 %v118
    %v391 = vpack.c.b16 %v360, %v359
    %v392 = vpack.c.b16 %v362, %v361
    %v393 = vpack.c.b16 %v364, %v363
    %v394 = vpack.c.b16 %v366, %v365
    %v395 = vpack.c.b16 %v368, %v367
    %v396 = vpack.c.b16 %v370, %v369
    %v397 = vpack.c.b16 %v372, %v371
    %v398 = vpack.c.b16 %v374, %v373
    %v399 = vpack.c.b16 %v376, %v375
    %v400 = vpack.c.b16 %v378, %v377
    %v401 = vpack.c.b16 %v380, %v379
    %v402 = vpack.c.b16 %v382, %v381
    %v403 = vpack.c.b16 %v384, %v383
    %v404 = vpack.c.b16 %v386, %v385
    %v405 = vpack.c.b16 %v388, %v387
    %v406 = vpack.c.b16 %v390, %v389
    %423 = vmatpush.bf16.msra.mxu0 %v398
    %424 = vmatpush.bf16.msra.mxu0 %v397
    %425 = vmatpush.bf16.msra.mxu0 %v396
    %426 = vmatpush.bf16.msra.mxu0 %v395
    %427 = vmatpush.bf16.msra.mxu0 %v394
    %428 = vmatpush.bf16.msra.mxu0 %v393
    %429 = vmatpush.bf16.msra.mxu0 %v392
    %430 = vmatpush.bf16.msra.mxu0 %v391
    %431 = vmatmul.bf16.gmra.mxu0 %v295
    %v432 = vpop.f32.mrf.mxu0
    %v433 = vadd.f32 0.0, %v432
    %v434 = vpop.f32.mrf.mxu0
    %v435 = vadd.f32 0.0, %v434
    %436 = vmatmul.bf16.gmra.mxu0 %v297
    %v437 = vpop.f32.mrf.mxu0
    %v438 = vadd.f32 0.0, %v437
    %v439 = vpop.f32.mrf.mxu0
    %v440 = vadd.f32 0.0, %v439
    %441 = vmatmul.bf16.gmra.mxu0 %v299
    %v442 = vpop.f32.mrf.mxu0
    %v443 = vadd.f32 0.0, %v442
    %v444 = vpop.f32.mrf.mxu0
    %v445 = vadd.f32 0.0, %v444
    %446 = vmatmul.bf16.gmra.mxu0 %v301
    %v447 = vpop.f32.mrf.mxu0
    %v448 = vadd.f32 0.0, %v447
    %v449 = vpop.f32.mrf.mxu0
    %v450 = vadd.f32 0.0, %v449
    %451 = vmatmul.bf16.gmra.mxu0 %v303
    %v452 = vpop.f32.mrf.mxu0
    %v453 = vadd.f32 0.0, %v452
    %v454 = vpop.f32.mrf.mxu0
    %v455 = vadd.f32 0.0, %v454
    %456 = vmatmul.bf16.gmra.mxu0 %v305
    %v457 = vpop.f32.mrf.mxu0
    %v458 = vadd.f32 0.0, %v457
    %v459 = vpop.f32.mrf.mxu0
    %v460 = vadd.f32 0.0, %v459
    %461 = vmatmul.bf16.gmra.mxu0 %v307
    %v462 = vpop.f32.mrf.mxu0
    %v463 = vadd.f32 0.0, %v462
    %v464 = vpop.f32.mrf.mxu0
    %v465 = vadd.f32 0.0, %v464
    %466 = vmatmul.bf16.gmra.mxu0 %v309
    %v467 = vpop.f32.mrf.mxu0
    %v468 = vadd.f32 0.0, %v467
    %v469 = vpop.f32.mrf.mxu0
    %v470 = vadd.f32 0.0, %v469
    %471 = vmatmul.bf16.gmra.mxu0 %v311
    %v472 = vpop.f32.mrf.mxu0
    %v473 = vadd.f32 0.0, %v472
    %v474 = vpop.f32.mrf.mxu0
    %v475 = vadd.f32 0.0, %v474
    %476 = vmatmul.bf16.gmra.mxu0 %v313
    %v477 = vpop.f32.mrf.mxu0
    %v478 = vadd.f32 0.0, %v477
    %v479 = vpop.f32.mrf.mxu0
    %v480 = vadd.f32 0.0, %v479
    %481 = vmatmul.bf16.gmra.mxu0 %v315
    %v482 = vpop.f32.mrf.mxu0
    %v483 = vadd.f32 0.0, %v482
    %v484 = vpop.f32.mrf.mxu0
    %v485 = vadd.f32 0.0, %v484
    %486 = vmatmul.bf16.gmra.mxu0 %v317
    %v487 = vpop.f32.mrf.mxu0
    %v488 = vadd.f32 0.0, %v487
    %v489 = vpop.f32.mrf.mxu0
    %v490 = vadd.f32 0.0, %v489
    %491 = vmatmul.bf16.gmra.mxu0 %v319
    %v492 = vpop.f32.mrf.mxu0
    %v493 = vadd.f32 0.0, %v492
    %v494 = vpop.f32.mrf.mxu0
    %v495 = vadd.f32 0.0, %v494
    %496 = vmatmul.bf16.gmra.mxu0 %v321
    %v497 = vpop.f32.mrf.mxu0
    %v498 = vadd.f32 0.0, %v497
    %v499 = vpop.f32.mrf.mxu0
    %v500 = vadd.f32 0.0, %v499
    %501 = vmatmul.bf16.gmra.mxu0 %v323
    %v502 = vpop.f32.mrf.mxu0
    %v503 = vadd.f32 0.0, %v502
    %v504 = vpop.f32.mrf.mxu0
    %v505 = vadd.f32 0.0, %v504
    %506 = vmatmul.bf16.gmra.mxu0 %v325
    %v507 = vpop.f32.mrf.mxu0
    %v508 = vadd.f32 0.0, %v507
    %v509 = vpop.f32.mrf.mxu0
    %v510 = vadd.f32 0.0, %v509
    %511 = vdwg.mxu0
    %512 = vmatpush.bf16.msra.mxu0 %v406
    %513 = vmatpush.bf16.msra.mxu0 %v405
    %514 = vmatpush.bf16.msra.mxu0 %v404
    %515 = vmatpush.bf16.msra.mxu0 %v403
    %516 = vmatpush.bf16.msra.mxu0 %v402
    %517 = vmatpush.bf16.msra.mxu0 %v401
    %518 = vmatpush.bf16.msra.mxu0 %v400
    %519 = vmatpush.bf16.msra.mxu0 %v399
    %520 = vmatmul.bf16.gmra.mxu0 %v296
    %v521 = vpop.f32.mrf.mxu0
    %v522 = vadd.f32 %v433, %v521
    %v523 = vpop.f32.mrf.mxu0
    %v524 = vadd.f32 %v435, %v523
    %525 = vmatmul.bf16.gmra.mxu0 %v298
    %v526 = vpop.f32.mrf.mxu0
    %v527 = vadd.f32 %v438, %v526
    %v528 = vpop.f32.mrf.mxu0
    %v529 = vadd.f32 %v440, %v528
    %530 = vmatmul.bf16.gmra.mxu0 %v300
    %v531 = vpop.f32.mrf.mxu0
    %v532 = vadd.f32 %v443, %v531
    %v533 = vpop.f32.mrf.mxu0
    %v534 = vadd.f32 %v445, %v533
    %535 = vmatmul.bf16.gmra.mxu0 %v302
    %v536 = vpop.f32.mrf.mxu0
    %v537 = vadd.f32 %v448, %v536
    %v538 = vpop.f32.mrf.mxu0
    %v539 = vadd.f32 %v450, %v538
    %540 = vmatmul.bf16.gmra.mxu0 %v304
    %v541 = vpop.f32.mrf.mxu0
    %v542 = vadd.f32 %v453, %v541
    %v543 = vpop.f32.mrf.mxu0
    %v544 = vadd.f32 %v455, %v543
    %545 = vmatmul.bf16.gmra.mxu0 %v306
    %v546 = vpop.f32.mrf.mxu0
    %v547 = vadd.f32 %v458, %v546
    %v548 = vpop.f32.mrf.mxu0
    %v549 = vadd.f32 %v460, %v548
    %550 = vmatmul.bf16.gmra.mxu0 %v308
    %v551 = vpop.f32.mrf.mxu0
    %v552 = vadd.f32 %v463, %v551
    %v553 = vpop.f32.mrf.mxu0
    %v554 = vadd.f32 %v465, %v553
    %555 = vmatmul.bf16.gmra.mxu0 %v310
    %v556 = vpop.f32.mrf.mxu0
    %v557 = vadd.f32 %v468, %v556
    %v558 = vpop.f32.mrf.mxu0
    %v559 = vadd.f32 %v470, %v558
    %560 = vmatmul.bf16.gmra.mxu0 %v312
    %v561 = vpop.f32.mrf.mxu0
    %v562 = vadd.f32 %v473, %v561
    %v563 = vpop.f32.mrf.mxu0
    %v564 = vadd.f32 %v475, %v563
    %565 = vmatmul.bf16.gmra.mxu0 %v314
    %v566 = vpop.f32.mrf.mxu0
    %v567 = vadd.f32 %v478, %v566
    %v568 = vpop.f32.mrf.mxu0
    %v569 = vadd.f32 %v480, %v568
    %570 = vmatmul.bf16.gmra.mxu0 %v316
    %v571 = vpop.f32.mrf.mxu0
    %v572 = vadd.f32 %v483, %v571
    %v573 = vpop.f32.mrf.mxu0
    %v574 = vadd.f32 %v485, %v573
    %575 = vmatmul.bf16.gmra.mxu0 %v318
    %v576 = vpop.f32.mrf.mxu0
    %v577 = vadd.f32 %v488, %v576
    %v578 = vpop.f32.mrf.mxu0
    %v579 = vadd.f32 %v490, %v578
    %580 = vmatmul.bf16.gmra.mxu0 %v320
    %v581 = vpop.f32.mrf.mxu0
    %v582 = vadd.f32 %v493, %v581
    %v583 = vpop.f32.mrf.mxu0
    %v584 = vadd.f32 %v495, %v583
    %585 = vmatmul.bf16.gmra.mxu0 %v322
    %v586 = vpop.f32.mrf.mxu0
    %v587 = vadd.f32 %v498, %v586
    %v588 = vpop.f32.mrf.mxu0
    %v589 = vadd.f32 %v500, %v588
    %590 = vmatmul.bf16.gmra.mxu0 %v324
    %v591 = vpop.f32.mrf.mxu0
    %v592 = vadd.f32 %v503, %v591
    %v593 = vpop.f32.mrf.mxu0
    %v594 = vadd.f32 %v505, %v593
    %595 = vmatmul.bf16.gmra.mxu0 %v326
    %v596 = vpop.f32.mrf.mxu0
    %v597 = vadd.f32 %v508, %v596
    %v598 = vpop.f32.mrf.mxu0
    %v599 = vadd.f32 %v510, %v598
    %600 = vdwg.mxu0
    %v601 = vadd.f32 %v119, %v522
    %v602 = vadd.f32 %v120, %v524
    %v603 = vadd.f32 %v121, %v527
    %v604 = vadd.f32 %v122, %v529
    %v605 = vadd.f32 %v123, %v532
    %v606 = vadd.f32 %v124, %v534
    %v607 = vadd.f32 %v125, %v537
    %v608 = vadd.f32 %v126, %v539
    %v609 = vadd.f32 %v127, %v542
    %v610 = vadd.f32 %v128, %v544
    %v611 = vadd.f32 %v129, %v547
    %v612 = vadd.f32 %v130, %v549
    %v613 = vadd.f32 %v131, %v552
    %v614 = vadd.f32 %v132, %v554
    %v615 = vadd.f32 %v133, %v557
    %v616 = vadd.f32 %v134, %v559
    %v617 = vadd.f32 %v135, %v562
    %v618 = vadd.f32 %v136, %v564
    %v619 = vadd.f32 %v137, %v567
    %v620 = vadd.f32 %v138, %v569
    %v621 = vadd.f32 %v139, %v572
    %v622 = vadd.f32 %v140, %v574
    %v623 = vadd.f32 %v141, %v577
    %v624 = vadd.f32 %v142, %v579
    %v625 = vadd.f32 %v143, %v582
    %v626 = vadd.f32 %v144, %v584
    %v627 = vadd.f32 %v145, %v587
    %v628 = vadd.f32 %v146, %v589
    %v629 = vadd.f32 %v147, %v592
    %v630 = vadd.f32 %v148, %v594
    %v631 = vadd.f32 %v149, %v597
    %v632 = vadd.f32 %v150, %v599
    %633 = vst [vmem:[#allocation7] sm:$0xff] %v601
    %634 = vst [vmem:[#allocation7 + $0x8] sm:$0xff] %v602
    %635 = vst [vmem:[#allocation7 + $0x10] sm:$0xff] %v603
    %636 = vst [vmem:[#allocation7 + $0x18] sm:$0xff] %v604
    %637 = vst [vmem:[#allocation7 + $0x20] sm:$0xff] %v605
    %638 = vst [vmem:[#allocation7 + $0x28] sm:$0xff] %v606
    %639 = vst [vmem:[#allocation7 + $0x30] sm:$0xff] %v607
    %640 = vst [vmem:[#allocation7 + $0x38] sm:$0xff] %v608
    %641 = vst [vmem:[#allocation7 + $0x40] sm:$0xff] %v609
    %642 = vst [vmem:[#allocation7 + $0x48] sm:$0xff] %v610
    %643 = vst [vmem:[#allocation7 + $0x50] sm:$0xff] %v611
    %644 = vst [vmem:[#allocation7 + $0x58] sm:$0xff] %v612
    %645 = vst [vmem:[#allocation7 + $0x60] sm:$0xff] %v613
    %646 = vst [vmem:[#allocation7 + $0x68] sm:$0xff] %v614
    %647 = vst [vmem:[#allocation7 + $0x70] sm:$0xff] %v615
    %648 = vst [vmem:[#allocation7 + $0x78] sm:$0xff] %v616
    %649 = vst [vmem:[#allocation7 + $0x80] sm:$0xff] %v617
    %650 = vst [vmem:[#allocation7 + $0x88] sm:$0xff] %v618
    %651 = vst [vmem:[#allocation7 + $0x90] sm:$0xff] %v619
    %652 = vst [vmem:[#allocation7 + $0x98] sm:$0xff] %v620
    %653 = vst [vmem:[#allocation7 + $0xa0] sm:$0xff] %v621
    %654 = vst [vmem:[#allocation7 + $0xa8] sm:$0xff] %v622
    %655 = vst [vmem:[#allocation7 + $0xb0] sm:$0xff] %v623
    %656 = vst [vmem:[#allocation7 + $0xb8] sm:$0xff] %v624
    %657 = vst [vmem:[#allocation7 + $0xc0] sm:$0xff] %v625
    %658 = vst [vmem:[#allocation7 + $0xc8] sm:$0xff] %v626
    %659 = vst [vmem:[#allocation7 + $0xd0] sm:$0xff] %v627
    %660 = vst [vmem:[#allocation7 + $0xd8] sm:$0xff] %v628
    %661 = vst [vmem:[#allocation7 + $0xe0] sm:$0xff] %v629
    %662 = vst [vmem:[#allocation7 + $0xe8] sm:$0xff] %v630
    %663 = vst [vmem:[#allocation7 + $0xf0] sm:$0xff] %v631
    %664 = vst [vmem:[#allocation7 + $0xf8] sm:$0xff] %v632
    // Predicated region
    $region26: #{tpu_custom_call.1} parent=1 // pred_check
      _
    $region27: #{tpu_custom_call.1} parent=1 // pred_check_branch
      %666 = sbr.rel (0) target = $region29
    $region28: #{tpu_custom_call.1} parent=1 // pred_region
      %668 = vsyncadd [#allocation4], 0
      %s669 = sshll.u32 [#allocation7], 4
      %s670 = int_to_ptr.vmem [resolvable:$true] %s669
      %s671 = sshll.u32 %s3, 4
      %s672 = int_to_ptr.hbm [resolvable:$true] %s671
      %677 = dma.vmem_to_hbm [thread:$0]  %s670, 4096, %s672, [#allocation4], 128, 128, 8
    $region29: #{tpu_custom_call.1} parent=1 // pred_fallthru
      _
    // Predicated region
    $region30: #{tpu_custom_call.1} parent=1 // pred_check
      _
    $region31: #{tpu_custom_call.1} parent=1 // pred_check_branch
      %679 = sbr.rel (0) target = $region33
    $region32: #{tpu_custom_call.1} parent=1 // pred_region
      %681 = dma.done [#allocation4], 4096
    $region33: #{tpu_custom_call.1} parent=1 // pred_fallthru
      _
    %682 = vsyncpa [#allocation3], 1
    %683 = vsyncpa [#allocation6], 1
    %684 = vsyncpa [#allocation4], 1

</llo_original>
